<compile_context>
chip_gen: v7x
topology: tpu7x:2x2x1
jax: 0.10.0
libtpu: 0.0.40
codegen_flags: <defaults>
</compile_context>

<pallas_src>
import functools

import jax
import jax.numpy as jnp
from jax.experimental import pallas as pl
from jax.experimental.pallas import tpu as pltpu

EPS = 1e-6


def _points2plane_kernel(pts_ref, nrm_ref, out_ref, acc_ref, *, inv_count):
    # pts_ref: (12, TB) f32, rows = [p0x,p0y,p0z, p1x,...,p3z], lanes = batch
    # nrm_ref: (3, TB)  f32, rows = [nx, ny, nz] (un-normalized plane normal)
    # out_ref: (1, 1)   f32 scalar loss
    # acc_ref: (1, 1)   f32 running sum of squared distances (VMEM scratch)
    i = pl.program_id(0)

    @pl.when(i == 0)
    def _():
        acc_ref[...] = jnp.zeros_like(acc_ref)

    nx = nrm_ref[0:1, :]
    ny = nrm_ref[1:2, :]
    nz = nrm_ref[2:3, :]

    nrm = jnp.sqrt(nx * nx + ny * ny + nz * nz)      # (1, TB)
    inv = 1.0 / (nrm + EPS)                          # exact, matches torch.norm + eps
    inv2 = inv * inv

    def proj(k):  # unnormalized projection d_k = p_k . n  (pure VALU FMAs)
        return (pts_ref[3 * k:3 * k + 1, :] * nx
                + pts_ref[3 * k + 1:3 * k + 2, :] * ny
                + pts_ref[3 * k + 2:3 * k + 3, :] * nz)

    d0, d1, d2, d3 = proj(0), proj(1), proj(2), proj(3)

    # vectors1 = p[1:] - p[:-1]  ->  d1-d0, d2-d1, d3-d2
    # vectors2 = p[2:] - p[0]    ->  d2-d0, d3-d0
    e0 = d1 - d0
    e1 = d2 - d1
    e2 = d3 - d2
    e3 = d2 - d0
    e4 = d3 - d0

    ssq = (e0 * e0 + e1 * e1 + e2 * e2 + e3 * e3 + e4 * e4) * inv2   # (1, TB)

    # Single cross-lane reduce per tile, accumulated in VMEM scratch.
    acc_ref[...] += jnp.sum(ssq, keepdims=True)

    @pl.when(i == pl.num_programs(0) - 1)
    def _():
        out_ref[...] = acc_ref[...] * inv_count      # mean over (b, 5)


def _round_up(x, m):
    return ((x + m - 1) // m) * m


def points2plane_loss(points, rot_mat, *, tb=2048):
    """points: (b, 4, 3) f32, rot_mat: (b, 3, 3) f32 -> scalar f32 loss."""
    b = points.shape[0]

    # Wrapper-side re-layout: batch on the lane axis, normal column pre-extracted.
    pts_t = points.reshape(b, 12).T.astype(jnp.float32)    # (12, B)
    nrm_t = rot_mat[:, :, 1].T.astype(jnp.float32)         # (3, B)

    # Lane tile: multiple of 128, capped so tiny batches use a single small tile.
    tb = _round_up(min(tb, _round_up(b, 128)), 128)
    padded = _round_up(b, tb)
    pad = padded - b
    if pad:
        pts_t = jnp.pad(pts_t, ((0, 0), (0, pad)))         # zero pads contribute 0
        nrm_t = jnp.pad(nrm_t, ((0, 0), (0, pad)))

    grid = padded // tb
    kernel = functools.partial(_points2plane_kernel, inv_count=1.0 / (b * 5))

    out = pl.pallas_call(
        kernel,
        out_shape=jax.ShapeDtypeStruct((1, 1), jnp.float32),
        grid=(grid,),
        in_specs=[
            pl.BlockSpec((12, tb), lambda i: (0, i)),
            pl.BlockSpec((3, tb), lambda i: (0, i)),
        ],
        out_specs=pl.BlockSpec((1, 1), lambda i: (0, 0)),
        scratch_shapes=[pltpu.VMEM((1, 1), jnp.float32)],
        compiler_params=pltpu.CompilerParams(
            dimension_semantics=("arbitrary",)),
        cost_estimate=pl.CostEstimate(
            flops=33 * padded,
            transcendentals=padded,
            bytes_accessed=60 * padded + 4),
    )(pts_t, nrm_t)
    return out[0, 0]


def reference_loss(points, rot_mat):
    """Pure-JAX transcription of the PyTorch forward, for verification."""
    normal = rot_mat[:, :, 1]                                          # (b, 3)
    n_hat = normal / (jnp.linalg.norm(normal, axis=1, keepdims=True) + EPS)
    v1 = points[:, 1:] - points[:, :-1]                                # (b, 3, 3)
    v2 = points[:, 2:] - points[:, 0:1]                                # (b, 2, 3)
    vectors = jnp.concatenate([v1, v2], axis=1)                        # (b, 5, 3)
    sq = jnp.sum(vectors * n_hat[:, None, :], axis=2) ** 2             # (b, 5)
    return jnp.mean(sq)


if __name__ == "__main__":
    key = jax.random.PRNGKey(0)
    k1, k2, k3, k4 = jax.random.split(key, 4)

    # Shapes implied by the module contract: points (b, 4, 3), rot_mat (b, 3, 3).
    b = 2
    points = jax.random.normal(k1, (b, 4, 3), dtype=jnp.float32)
    rot_mat = jax.random.normal(k2, (b, 3, 3), dtype=jnp.float32)

    loss = points2plane_loss(points, rot_mat)
    jax.block_until_ready(loss)
    ref = reference_loss(points, rot_mat)
    assert jnp.allclose(loss, ref, atol=1e-5, rtol=1e-5), (loss, ref)

    # Exercise the multi-tile accumulator path (grid of 3 tiles).
    b2 = 300
    points2 = jax.random.normal(k3, (b2, 4, 3), dtype=jnp.float32)
    rot2 = jax.random.normal(k4, (b2, 3, 3), dtype=jnp.float32)
    loss2 = points2plane_loss(points2, rot2, tb=128)
    jax.block_until_ready(loss2)
    ref2 = reference_loss(points2, rot2)
    assert jnp.allclose(loss2, ref2, atol=1e-5, rtol=1e-5), (loss2, ref2)

    print("KERNEL_OK")
</pallas_src>

<mosaic_0001>
module attributes {stable_mosaic.version = 11 : i64} {
  func.func @_points2plane_kernel(%arg0: i32, %arg1: memref<12x128xf32, #tpu.memory_space<vmem>>, %arg2: memref<3x128xf32, #tpu.memory_space<vmem>>, %arg3: memref<1x1xf32, #tpu.memory_space<vmem>>, %arg4: memref<1x1xf32, #tpu.memory_space<vmem>>) attributes {dimension_semantics = [#tpu.dimension_semantics<arbitrary>], iteration_bounds = array<i64: 1>, scalar_prefetch = 0 : i64, scratch_operands = 1 : i64, tpu.core_type = #tpu.core_type<tc>, window_params = [{transform_indices = @transform_0, window_bounds = array<i64: 12, 128>}, {transform_indices = @transform_1, window_bounds = array<i64: 3, 128>}, {pipeline_mode = #tpu.pipeline_mode<synchronous>, transform_indices = @transform_2, window_bounds = array<i64: 1, 1>}]} {
    %c0_i32 = arith.constant 0 : i32
    %0 = arith.cmpi eq, %arg0, %c0_i32 : i32
    %1 = arith.extui %0 : i1 to i32
    %c0_i32_0 = arith.constant 0 : i32
    %2 = arith.cmpi ne, %1, %c0_i32_0 : i32
    scf.if %2 {
      %cst_27 = arith.constant 0.000000e+00 : f32
      %75 = vector.broadcast %cst_27 : f32 to vector<1x1xf32>
      %c0_28 = arith.constant 0 : index
      %c0_29 = arith.constant 0 : index
      %76 = vector.load %arg4[%c0_28, %c0_29] : memref<1x1xf32, #tpu.memory_space<vmem>>, vector<1x1xf32>
      tpu.vector_store %arg4[%c0_28, %c0_29], %75 {strides = array<i32>} : memref<1x1xf32, #tpu.memory_space<vmem>>, vector<1x1xf32>,
    } else {
    }
    %c0 = arith.constant 0 : index
    %c0_1 = arith.constant 0 : index
    %3 = vector.load %arg2[%c0, %c0_1] : memref<3x128xf32, #tpu.memory_space<vmem>>, vector<1x128xf32>
    %c1 = arith.constant 1 : index
    %c0_2 = arith.constant 0 : index
    %4 = vector.load %arg2[%c1, %c0_2] : memref<3x128xf32, #tpu.memory_space<vmem>>, vector<1x128xf32>
    %c2 = arith.constant 2 : index
    %c0_3 = arith.constant 0 : index
    %5 = vector.load %arg2[%c2, %c0_3] : memref<3x128xf32, #tpu.memory_space<vmem>>, vector<1x128xf32>
    %6 = arith.mulf %3, %3 : vector<1x128xf32>
    %7 = arith.mulf %4, %4 : vector<1x128xf32>
    %8 = arith.addf %6, %7 : vector<1x128xf32>
    %9 = arith.mulf %5, %5 : vector<1x128xf32>
    %10 = arith.addf %8, %9 : vector<1x128xf32>
    %11 = math.sqrt %10 : vector<1x128xf32>
    %cst = arith.constant 9.99999997E-7 : f32
    %12 = vector.broadcast %cst : f32 to vector<1x128xf32>
    %13 = arith.addf %11, %12 : vector<1x128xf32>
    %cst_4 = arith.constant 1.000000e+00 : f32
    %14 = vector.broadcast %cst_4 : f32 to vector<1x128xf32>
    %15 = arith.divf %14, %13 : vector<1x128xf32>
    %16 = arith.mulf %15, %15 : vector<1x128xf32>
    %c0_5 = arith.constant 0 : index
    %c0_6 = arith.constant 0 : index
    %17 = vector.load %arg1[%c0_5, %c0_6] : memref<12x128xf32, #tpu.memory_space<vmem>>, vector<1x128xf32>
    %18 = arith.mulf %17, %3 : vector<1x128xf32>
    %c1_7 = arith.constant 1 : index
    %c0_8 = arith.constant 0 : index
    %19 = vector.load %arg1[%c1_7, %c0_8] : memref<12x128xf32, #tpu.memory_space<vmem>>, vector<1x128xf32>
    %20 = arith.mulf %19, %4 : vector<1x128xf32>
    %21 = arith.addf %18, %20 : vector<1x128xf32>
    %c2_9 = arith.constant 2 : index
    %c0_10 = arith.constant 0 : index
    %22 = vector.load %arg1[%c2_9, %c0_10] : memref<12x128xf32, #tpu.memory_space<vmem>>, vector<1x128xf32>
    %23 = arith.mulf %22, %5 : vector<1x128xf32>
    %24 = arith.addf %21, %23 : vector<1x128xf32>
    %c3 = arith.constant 3 : index
    %c0_11 = arith.constant 0 : index
    %25 = vector.load %arg1[%c3, %c0_11] : memref<12x128xf32, #tpu.memory_space<vmem>>, vector<1x128xf32>
    %26 = arith.mulf %25, %3 : vector<1x128xf32>
    %c4 = arith.constant 4 : index
    %c0_12 = arith.constant 0 : index
    %27 = vector.load %arg1[%c4, %c0_12] : memref<12x128xf32, #tpu.memory_space<vmem>>, vector<1x128xf32>
    %28 = arith.mulf %27, %4 : vector<1x128xf32>
    %29 = arith.addf %26, %28 : vector<1x128xf32>
    %c5 = arith.constant 5 : index
    %c0_13 = arith.constant 0 : index
    %30 = vector.load %arg1[%c5, %c0_13] : memref<12x128xf32, #tpu.memory_space<vmem>>, vector<1x128xf32>
    %31 = arith.mulf %30, %5 : vector<1x128xf32>
    %32 = arith.addf %29, %31 : vector<1x128xf32>
    %c6 = arith.constant 6 : index
    %c0_14 = arith.constant 0 : index
    %33 = vector.load %arg1[%c6, %c0_14] : memref<12x128xf32, #tpu.memory_space<vmem>>, vector<1x128xf32>
    %34 = arith.mulf %33, %3 : vector<1x128xf32>
    %c7 = arith.constant 7 : index
    %c0_15 = arith.constant 0 : index
    %35 = vector.load %arg1[%c7, %c0_15] : memref<12x128xf32, #tpu.memory_space<vmem>>, vector<1x128xf32>
    %36 = arith.mulf %35, %4 : vector<1x128xf32>
    %37 = arith.addf %34, %36 : vector<1x128xf32>
    %c8 = arith.constant 8 : index
    %c0_16 = arith.constant 0 : index
    %38 = vector.load %arg1[%c8, %c0_16] : memref<12x128xf32, #tpu.memory_space<vmem>>, vector<1x128xf32>
    %39 = arith.mulf %38, %5 : vector<1x128xf32>
    %40 = arith.addf %37, %39 : vector<1x128xf32>
    %c9 = arith.constant 9 : index
    %c0_17 = arith.constant 0 : index
    %41 = vector.load %arg1[%c9, %c0_17] : memref<12x128xf32, #tpu.memory_space<vmem>>, vector<1x128xf32>
    %42 = arith.mulf %41, %3 : vector<1x128xf32>
    %c10 = arith.constant 10 : index
    %c0_18 = arith.constant 0 : index
    %43 = vector.load %arg1[%c10, %c0_18] : memref<12x128xf32, #tpu.memory_space<vmem>>, vector<1x128xf32>
    %44 = arith.mulf %43, %4 : vector<1x128xf32>
    %45 = arith.addf %42, %44 : vector<1x128xf32>
    %c11 = arith.constant 11 : index
    %c0_19 = arith.constant 0 : index
    %46 = vector.load %arg1[%c11, %c0_19] : memref<12x128xf32, #tpu.memory_space<vmem>>, vector<1x128xf32>
    %47 = arith.mulf %46, %5 : vector<1x128xf32>
    %48 = arith.addf %45, %47 : vector<1x128xf32>
    %49 = arith.subf %32, %24 : vector<1x128xf32>
    %50 = arith.subf %40, %32 : vector<1x128xf32>
    %51 = arith.subf %48, %40 : vector<1x128xf32>
    %52 = arith.subf %40, %24 : vector<1x128xf32>
    %53 = arith.subf %48, %24 : vector<1x128xf32>
    %54 = arith.mulf %49, %49 : vector<1x128xf32>
    %55 = arith.mulf %50, %50 : vector<1x128xf32>
    %56 = arith.addf %54, %55 : vector<1x128xf32>
    %57 = arith.mulf %51, %51 : vector<1x128xf32>
    %58 = arith.addf %56, %57 : vector<1x128xf32>
    %59 = arith.mulf %52, %52 : vector<1x128xf32>
    %60 = arith.addf %58, %59 : vector<1x128xf32>
    %61 = arith.mulf %53, %53 : vector<1x128xf32>
    %62 = arith.addf %60, %61 : vector<1x128xf32>
    %63 = arith.mulf %62, %16 : vector<1x128xf32>
    %c0_20 = arith.constant 0 : index
    %c0_21 = arith.constant 0 : index
    %64 = vector.load %arg4[%c0_20, %c0_21] : memref<1x1xf32, #tpu.memory_space<vmem>>, vector<1x1xf32>
    %65 = vector.shape_cast %63 : vector<1x128xf32> to vector<1x1x128xf32>
    %cst_22 = arith.constant dense<0.000000e+00> : vector<1xf32>
    %66 = vector.multi_reduction <add>, %65, %cst_22 [1, 2] : vector<1x1x128xf32> to vector<1xf32>
    %67 = vector.shape_cast %66 : vector<1xf32> to vector<1x1x1xf32>
    %68 = vector.extract %67[0, 0, 0] : f32 from vector<1x1x1xf32>
    %69 = vector.broadcast %68 : f32 to vector<1x1xf32>
    %70 = arith.addf %64, %69 : vector<1x1xf32>
    %c0_23 = arith.constant 0 : index
    %c0_24 = arith.constant 0 : index
    %71 = vector.load %arg4[%c0_23, %c0_24] : memref<1x1xf32, #tpu.memory_space<vmem>>, vector<1x1xf32>
    tpu.vector_store %arg4[%c0_23, %c0_24], %70 {strides = array<i32>} : memref<1x1xf32, #tpu.memory_space<vmem>>, vector<1x1xf32>,
    %c0_i32_25 = arith.constant 0 : i32
    %72 = arith.cmpi eq, %arg0, %c0_i32_25 : i32
    %73 = arith.extui %72 : i1 to i32
    %c0_i32_26 = arith.constant 0 : i32
    %74 = arith.cmpi ne, %73, %c0_i32_26 : i32
    scf.if %74 {
      %c0_27 = arith.constant 0 : index
      %c0_28 = arith.constant 0 : index
      %75 = vector.load %arg4[%c0_27, %c0_28] : memref<1x1xf32, #tpu.memory_space<vmem>>, vector<1x1xf32>
      %cst_29 = arith.constant 1.000000e-01 : f32
      %76 = vector.broadcast %cst_29 : f32 to vector<1x1xf32>
      %77 = arith.mulf %75, %76 : vector<1x1xf32>
      %c0_30 = arith.constant 0 : index
      %c0_31 = arith.constant 0 : index
      %78 = vector.load %arg3[%c0_30, %c0_31] : memref<1x1xf32, #tpu.memory_space<vmem>>, vector<1x1xf32>
      tpu.vector_store %arg3[%c0_30, %c0_31], %77 {strides = array<i32>} : memref<1x1xf32, #tpu.memory_space<vmem>>, vector<1x1xf32>,
    } else {
    }
    return
  }
  func.func @transform_0(%arg0: i32) -> (i32, i32) {
    %c0_i32 = arith.constant 0 : i32
    %c0_i32_0 = arith.constant 0 : i32
    return %c0_i32, %arg0 : i32, i32
  }
  func.func @transform_1(%arg0: i32) -> (i32, i32) {
    %c0_i32 = arith.constant 0 : i32
    %c0_i32_0 = arith.constant 0 : i32
    return %c0_i32, %arg0 : i32, i32
  }
  func.func @transform_2(%arg0: i32) -> (i32, i32) {
    %c0_i32 = arith.constant 0 : i32
    %c0_i32_0 = arith.constant 0 : i32
    %c0_i32_1 = arith.constant 0 : i32
    return %c0_i32, %c0_i32_0 : i32, i32
  }
}

</mosaic_0001>

<llo_original>
// kernel: tpu_custom_call.1
$region0: #{tpu_custom_call.1}
  #allocation0 [shape = 'u32[]', space=smem, size = 0x4, offset = 0x4, fixed_abs, tag = 'smem constant byte address 0x4 - core index']
  #allocation1 [shape = 'u32[144,128]{1,0:T(1,128)}', space=vmem, size = 0x12000, scoped, tag = 'internal scratch']
  #allocation2 [shape = 'f32[1,1]{1,0:T(1,128)}', space=vmem, size = 0x200, scoped, tag = 'scratch operand']
  %s0 = inlined_call_operand.hbm [shape: f32[12,128], index: 0, kind: input, shape index: {}]
  %s1 = inlined_call_operand.hbm [shape: f32[3,128], index: 1, kind: input, shape index: {}]
  %s2 = inlined_call_operand.hbm [shape: f32[1,1], index: 2, kind: output, shape index: {}]
  %s3 = sld [smem:[#allocation0]]
  $region34: #{tpu_custom_call.1} parent=0
    _
  %s5 = ssub.s32 1, %s3
  %s6 = scalar_select 0, %s5, %s3
  $region1: #{tpu_custom_call.1} parent=0
    #allocation3 [shape = 'u8[8192]{0}', space=vmem, size = 0x2000, scoped, tag = 'input window, operand 0, single buffered']
    #allocation4 [shape = 's32[1]{0}', space=sflag, size = 0x4, scoped, tag = 'scoped memory for tpu_custom_call.1']
    #allocation5 [shape = 's32[1]{0}', space=sflag, size = 0x4, scoped, tag = 'scoped memory for tpu_custom_call.1']
    #allocation6 [shape = 'u8[2048]{0}', space=vmem, size = 0x800, scoped, tag = 'input window, operand 1, single buffered']
    #allocation7 [shape = 's32[1]{0}', space=sflag, size = 0x4, scoped, tag = 'scoped memory for tpu_custom_call.1']
    #allocation8 [shape = 'u8[512]{0}', space=vmem, size = 0x400, scoped, tag = 'output window, operand 0, single buffered']
    %7 = vsyncpa [#allocation4], 0
    %8 = vsyncpa [#allocation7], 0
    %9 = vsyncpa [#allocation5], 0
    // Predicated region
    $region2: #{tpu_custom_call.1} parent=1 // pred_check
      _
    $region3: #{tpu_custom_call.1} parent=1 // pred_check_branch
      %11 = sbr.rel (0) target = $region5
    $region4: #{tpu_custom_call.1} parent=1 // pred_region
      %s13 = ssub.s32 256, 256
      %14 = vsyncadd [#allocation4], %s13
      %s15 = sshll.u32 [#allocation3], 4
      %s16 = int_to_ptr.vmem [resolvable:$true] %s15
      %21 = dma.hbm_to_vmem [thread:$0]  %s0, 256, %s16, [#allocation4], 128, 128, 8
    $region5: #{tpu_custom_call.1} parent=1 // pred_fallthru
      _
    // Predicated region
    $region6: #{tpu_custom_call.1} parent=1 // pred_check
      _
    $region7: #{tpu_custom_call.1} parent=1 // pred_check_branch
      %23 = sbr.rel (0) target = $region9
    $region8: #{tpu_custom_call.1} parent=1 // pred_region
      %s25 = ssub.s32 64, 64
      %26 = vsyncadd [#allocation7], %s25
      %s28 = sshll.u32 [#allocation6], 4
      %s29 = int_to_ptr.vmem [resolvable:$true] %s28
      %31 = dma.hbm_to_vmem [thread:$0]  %s1, 64, %s29, [#allocation7]
    $region9: #{tpu_custom_call.1} parent=1 // pred_fallthru
      _
    // Predicated region
    $region10: #{tpu_custom_call.1} parent=1 // pred_check
      _
    $region11: #{tpu_custom_call.1} parent=1 // pred_check_branch
      %33 = sbr.rel (0) target = $region13
    $region12: #{tpu_custom_call.1} parent=1 // pred_region
      %34 = dma.done [#allocation4], 256
    $region13: #{tpu_custom_call.1} parent=1 // pred_fallthru
      _
    // Predicated region
    $region14: #{tpu_custom_call.1} parent=1 // pred_check
      _
    $region15: #{tpu_custom_call.1} parent=1 // pred_check_branch
      %36 = sbr.rel (0) target = $region17
    $region16: #{tpu_custom_call.1} parent=1 // pred_region
      %37 = dma.done [#allocation7], 64
    $region17: #{tpu_custom_call.1} parent=1 // pred_fallthru
      _
    %p38 = scmp.eq.s32.totalorder 0, 0
    // Predicated region
    $region18: #{tpu_custom_call.1} parent=1 // pred_check
      %p39 = pneg %p38
    $region19: #{tpu_custom_call.1} parent=1 // pred_check_branch
      %41 = sbr.rel (%p39) target = $region21
    $region20: #{tpu_custom_call.1} parent=1 // pred_region
      %vm42 = vcmask 0
      %43 = vst.msk [vmem:[#allocation2] sm:$0x1] %vm42, 0.0
    $region21: #{tpu_custom_call.1} parent=1 // pred_fallthru
      _
    %v44 = vld [vmem:[#allocation6] sm:$0x1]
    %v45 = vld [vmem:[#allocation6 + $0x1] sm:$0x1]
    %v46 = vld [vmem:[#allocation6 + $0x2] sm:$0x1]
    %v47 = vmul.f32 %v44, %v44
    %v48 = vmul.f32 %v45, %v45
    %v49 = vadd.f32 %v47, %v48
    %v50 = vmul.f32 %v46, %v46
    %v51 = vadd.f32 %v49, %v50
    %v52 = vrsqrt.pop %v51
    %v53 = vmul.f32 %v51, %v52
    %vm54 = vcmp.eq.f32.partialorder %v51, inf
    %v55 = vsel %vm54, %v51, %v53
    %vm56 = vcmp.eq.f32.partialorder %v51, 0.0
    %v57 = vand.u32 %v51, 2147483648
    %v58 = vsel %vm56, %v57, %v55
    %v59 = vadd.f32 %v58, 1e-06
    %v60 = vrcp.pop %v59
    %v61 = vmul.f32 1.0, %v60
    %v62 = vmul.f32 %v61, %v61
    %v63 = vld [vmem:[#allocation3] sm:$0x1]
    %v64 = vmul.f32 %v63, %v44
    %v65 = vld [vmem:[#allocation3 + $0x1] sm:$0x1]
    %v66 = vmul.f32 %v65, %v45
    %v67 = vadd.f32 %v64, %v66
    %v68 = vld [vmem:[#allocation3 + $0x2] sm:$0x1]
    %v69 = vmul.f32 %v68, %v46
    %v70 = vadd.f32 %v67, %v69
    %v71 = vld [vmem:[#allocation3 + $0x3] sm:$0x1]
    %v72 = vmul.f32 %v71, %v44
    %v73 = vld [vmem:[#allocation3 + $0x4] sm:$0x1]
    %v74 = vmul.f32 %v73, %v45
    %v75 = vadd.f32 %v72, %v74
    %v76 = vld [vmem:[#allocation3 + $0x5] sm:$0x1]
    %v77 = vmul.f32 %v76, %v46
    %v78 = vadd.f32 %v75, %v77
    %v79 = vld [vmem:[#allocation3 + $0x6] sm:$0x1]
    %v80 = vmul.f32 %v79, %v44
    %v81 = vld [vmem:[#allocation3 + $0x7] sm:$0x1]
    %v82 = vmul.f32 %v81, %v45
    %v83 = vadd.f32 %v80, %v82
    %v84 = vld [vmem:[#allocation3 + $0x8] sm:$0x1]
    %v85 = vmul.f32 %v84, %v46
    %v86 = vadd.f32 %v83, %v85
    %v87 = vld [vmem:[#allocation3 + $0x9] sm:$0x1]
    %v88 = vmul.f32 %v87, %v44
    %v89 = vld [vmem:[#allocation3 + $0xa] sm:$0x1]
    %v90 = vmul.f32 %v89, %v45
    %v91 = vadd.f32 %v88, %v90
    %v92 = vld [vmem:[#allocation3 + $0xb] sm:$0x1]
    %v93 = vmul.f32 %v92, %v46
    %v94 = vadd.f32 %v91, %v93
    %v95 = vsub.f32 %v78, %v70
    %v96 = vsub.f32 %v86, %v78
    %v97 = vsub.f32 %v94, %v86
    %v98 = vsub.f32 %v86, %v70
    %v99 = vsub.f32 %v94, %v70
    %v100 = vmul.f32 %v95, %v95
    %v101 = vmul.f32 %v96, %v96
    %v102 = vadd.f32 %v100, %v101
    %v103 = vmul.f32 %v97, %v97
    %v104 = vadd.f32 %v102, %v103
    %v105 = vmul.f32 %v98, %v98
    %v106 = vadd.f32 %v104, %v105
    %v107 = vmul.f32 %v99, %v99
    %v108 = vadd.f32 %v106, %v107
    %v109 = vmul.f32 %v108, %v62
    %v110 = vld [vmem:[#allocation2] sm:$0x1]
    %vm111 = vcmask 1040384
    %v112 = vsel %vm111, %v109, 0.0
    %113 = vadd.xlane.f32.xlu0 %v112
    %v114 = vpop.xlane.xlu0 %113
    %v115 = vrot.slane %v114, 4
    %v116 = vadd.f32 %v114, %v115
    %v117 = vrot.slane %v116, 2
    %v118 = vadd.f32 %v116, %v117
    %v119 = vrot.slane %v118, 1
    %v120 = vadd.f32 %v118, %v119
    %s121 = vtos %v120
    %v122 = vstv %s121
    %v123 = vadd.f32 %v110, %v122
    %vm124 = vcmask 0
    %125 = vst.msk [vmem:[#allocation2] sm:$0x1] %vm124, %v123
    // Predicated region
    $region22: #{tpu_custom_call.1} parent=1 // pred_check
      %p126 = pneg %p38
    $region23: #{tpu_custom_call.1} parent=1 // pred_check_branch
      %128 = sbr.rel (%p126) target = $region25
    $region24: #{tpu_custom_call.1} parent=1 // pred_region
      %v129 = vld [vmem:[#allocation2] sm:$0x1]
      %v130 = vmul.f32 %v129, 0.1
      %131 = vst.msk [vmem:[#allocation8] sm:$0x1] %vm124, %v130
    $region25: #{tpu_custom_call.1} parent=1 // pred_fallthru
      _
    // Predicated region
    $region26: #{tpu_custom_call.1} parent=1 // pred_check
      _
    $region27: #{tpu_custom_call.1} parent=1 // pred_check_branch
      %133 = sbr.rel (0) target = $region29
    $region28: #{tpu_custom_call.1} parent=1 // pred_region
      %s135 = ssub.s32 16, 16
      %136 = vsyncadd [#allocation5], %s135
      %s138 = sshll.u32 [#allocation8], 4
      %s139 = int_to_ptr.vmem [resolvable:$true] %s138
      %141 = dma.vmem_to_hbm [thread:$0]  %s139, 16, %s2, [#allocation5]
    $region29: #{tpu_custom_call.1} parent=1 // pred_fallthru
      _
    // Predicated region
    $region30: #{tpu_custom_call.1} parent=1 // pred_check
      _
    $region31: #{tpu_custom_call.1} parent=1 // pred_check_branch
      %143 = sbr.rel (0) target = $region33
    $region32: #{tpu_custom_call.1} parent=1 // pred_region
      %144 = dma.done [#allocation5], 16
    $region33: #{tpu_custom_call.1} parent=1 // pred_fallthru
      _
    %145 = vsyncpa [#allocation4], 1
    %146 = vsyncpa [#allocation7], 1
    %147 = vsyncpa [#allocation5], 1

</llo_original>
